<compile_context>
chip_gen: v7x
topology: tpu7x:2x2x1
jax: 0.10.0
libtpu: 0.0.40
codegen_flags: <defaults>
</compile_context>

<pallas_src>
import jax
import jax.numpy as jnp
from jax.experimental import pallas as pl
from jax.experimental.pallas import tpu as pltpu


def _gelu_exact(v):
    # torch.nn.GELU() default = exact erf formulation.
    return 0.5 * v * (1.0 + jax.lax.erf(v * 0.7071067811865475))


def _combined_antialias_kernel(x_ref, wdw_ref, wpw_ref, o_ref):
    # x_ref:   (1, C, L)      bf16  -- one batch element
    # wdw_ref: (C, L, Lp)     bf16  -- fused (low-pass o depthwise strided conv), Lout padded to Lp
    # wpw_ref: (Cout, C)      bf16  -- pointwise 1x1 conv weight
    # o_ref:   (1, Cout, Lp)  f32
    x = x_ref[...]
    wdw = wdw_ref[...]
    wpw = wpw_ref[...]

    # 1+2) anti-alias low-pass + depthwise strided conv (fused at glue time):
    #      per-channel time contraction on the MXU (batch dim C), bf16 in, f32 accumulate.
    y = jnp.einsum("bcl,clt->cbt", x, wdw,
                   preferred_element_type=jnp.float32)          # (C, 1, Lp) f32
    y = y[:, 0, :]                                              # (C, Lp)    f32

    # 3) pointwise 1x1 conv: channel mix on the MXU, bf16 in, f32 accumulate.
    z = jnp.dot(wpw, y.astype(wpw.dtype),
                preferred_element_type=jnp.float32)             # (Cout, Lp) f32

    # 4) GELU twice (the module's drop branch re-applies self.act), f32, output tile only.
    o_ref[0] = _gelu_exact(_gelu_exact(z)).astype(o_ref.dtype)


def combined_antialias(x_bf16, wdw_fused_bf16, wpw_bf16, lout):
    """x_bf16: (B, C, L) bf16; wdw_fused_bf16: (C, L, Lp) bf16 with Lp a multiple of 128;
    wpw_bf16: (Cout, C) bf16.  Returns (B, Cout, lout) f32."""
    B, C, L = x_bf16.shape
    Cout = wpw_bf16.shape[0]
    Lp = wdw_fused_bf16.shape[-1]
    out = pl.pallas_call(
        _combined_antialias_kernel,
        out_shape=jax.ShapeDtypeStruct((B, Cout, Lp), jnp.float32),
        grid=(B,),
        in_specs=[
            pl.BlockSpec((1, C, L), lambda b: (b, 0, 0)),
            pl.BlockSpec((C, L, Lp), lambda b: (0, 0, 0)),   # grid-invariant -> stays resident
            pl.BlockSpec((Cout, C), lambda b: (0, 0)),       # grid-invariant -> stays resident
        ],
        out_specs=pl.BlockSpec((1, Cout, Lp), lambda b: (b, 0, 0)),
        compiler_params=pltpu.CompilerParams(
            dimension_semantics=("parallel",)),              # pipelining + v7x megacore split
    )(x_bf16, wdw_fused_bf16, wpw_bf16)
    return out[:, :, :lout]


def build_fused_operators(w_dw, w_pw, L, kernel_size, stride, cin, cout):
    """Glue: build the fused (low-pass o depthwise) operator in f32, pad the output-time
    axis to a lane-dense multiple of 128, and cast weights to bf16 for storage/MXU feed."""
    pad = (kernel_size - 1) // 2
    lout = (L + 2 * pad - kernel_size) // stride + 1
    # ICR / nyquist index exactly as the module computes them.
    icr = min(cout / cin, kernel_size) / stride
    F = L // 2 + 1
    nyq = int(F * (icr / 2.0))
    mask = (jnp.arange(F) < nyq).astype(jnp.float32)
    # Ideal low-pass operator = rfft -> mask -> irfft (ortho) applied to the identity.
    eye = jnp.eye(L, dtype=jnp.float32)
    lp = jnp.fft.irfft(jnp.fft.rfft(eye, axis=-1, norm="ortho") * mask,
                       n=L, axis=-1, norm="ortho").astype(jnp.float32)          # (L, L)
    # Depthwise strided conv (groups=C, no bias) as per-channel (L, Lout) matrices.
    t = jnp.arange(lout)
    j = jnp.arange(kernel_size)
    src = t[:, None] * stride - pad + j[None, :]                                # (Lout, k)
    valid = (src >= 0) & (src < L)
    onehot = ((src[None, :, :] == jnp.arange(L)[:, None, None]) & valid[None]
              ).astype(jnp.float32)                                             # (L, Lout, k)
    wdw_mat = jnp.einsum("ltk,ck->clt", onehot, w_dw)                           # (C, L, Lout)
    # Fuse the low-pass into the depthwise operator in f32 (before any bf16 cast).
    wdw_fused = jnp.einsum("lm,cmt->clt", lp, wdw_mat,
                           precision=jax.lax.Precision.HIGHEST)                 # (C, L, Lout)
    # Lane-dense padding of the output-time axis (128 multiple) -> unmasked stores.
    wdw_fused = jnp.pad(wdw_fused, ((0, 0), (0, 0), (0, (-lout) % 128)))
    # TODO(synk): at production C*L*Lout sizes, replace the dense fused operator with a
    # separate low-pass matmul + k-tap shifted-slice depthwise conv to bound VMEM/HBM use.
    return (wdw_fused.astype(jnp.bfloat16), w_pw.astype(jnp.bfloat16),
            lout, nyq, pad)


def _reference_fft(x, w_dw, w_pw, nyq, stride, pad):
    """Pure-JAX f32 reference mirroring the PyTorch module (real FFTs + lax convs)."""
    xf = jnp.fft.rfft(x, axis=-1, norm="ortho")
    keep = jnp.arange(xf.shape[-1]) < nyq
    xf = jnp.where(keep, xf, 0)
    xt = jnp.fft.irfft(xf, n=x.shape[-1], axis=-1, norm="ortho")
    C = x.shape[1]
    dw = jax.lax.conv_general_dilated(
        xt, w_dw[:, None, :], window_strides=(stride,), padding=[(pad, pad)],
        dimension_numbers=("NCH", "OIH", "NCH"), feature_group_count=C,
        precision=jax.lax.Precision.HIGHEST)
    pw = jax.lax.conv_general_dilated(
        dw, w_pw[:, :, None], window_strides=(1,), padding=[(0, 0)],
        dimension_numbers=("NCH", "OIH", "NCH"),
        precision=jax.lax.Precision.HIGHEST)
    return _gelu_exact(_gelu_exact(pw))


def _reference_bf16_math(x_bf16, wdw_fused_bf16, wpw_bf16, lout):
    """Exact model of the kernel numerics: bf16-quantized operands, f32 accumulation."""
    xq = x_bf16.astype(jnp.float32)
    wdwq = wdw_fused_bf16[:, :, :lout].astype(jnp.float32)
    wpwq = wpw_bf16.astype(jnp.float32)
    y = jnp.einsum("bcl,clt->bct", xq, wdwq, precision=jax.lax.Precision.HIGHEST)
    y = y.astype(jnp.bfloat16).astype(jnp.float32)
    z = jnp.einsum("oc,bct->bot", wpwq, y, precision=jax.lax.Precision.HIGHEST)
    return _gelu_exact(_gelu_exact(z))


if __name__ == "__main__":
    # configs: kernel_size=3, down_sampling_window(stride)=2, dropout=0.1 (unused at eval)
    B, Cin, Cout, L = 2, 4, 8, 16
    kernel_size, stride = 3, 2

    key = jax.random.PRNGKey(0)
    kx, kdw, kpw = jax.random.split(key, 3)
    x = jax.random.normal(kx, (B, Cin, L), dtype=jnp.float32)
    # DWConv weight is (Cin, 1, k) in torch -> (Cin, k) here; PWConv is (Cout, Cin, 1) -> (Cout, Cin).
    w_dw = 0.5 * jax.random.normal(kdw, (Cin, kernel_size), dtype=jnp.float32)
    w_pw = 0.5 * jax.random.normal(kpw, (Cout, Cin), dtype=jnp.float32)

    # --- glue: build fused / padded bf16 operators -----------------------------
    wdw_fused_bf16, wpw_bf16, lout, nyq, pad = build_fused_operators(
        w_dw, w_pw, L, kernel_size, stride, Cin, Cout)
    x_bf16 = x.astype(jnp.bfloat16)

    # --- run kernel -------------------------------------------------------------
    out = jax.block_until_ready(
        combined_antialias(x_bf16, wdw_fused_bf16, wpw_bf16, lout))
    assert out.shape == (B, Cout, lout), out.shape

    # --- verify 1: kernel math is exact given the same bf16-quantized operands ---
    ref_tight = _reference_bf16_math(x_bf16, wdw_fused_bf16, wpw_bf16, lout)
    assert jnp.allclose(out, ref_tight, atol=2e-4, rtol=2e-4), \
        float(jnp.max(jnp.abs(out - ref_tight)))

    # --- verify 2: module semantics (f32 FFT + conv reference), bf16-storage bound ---
    ref_fft = _reference_fft(x, w_dw, w_pw, nyq, stride, pad)
    assert jnp.allclose(out, ref_fft, atol=1e-1, rtol=1e-1), \
        float(jnp.max(jnp.abs(out - ref_fft)))

    # TODO(synk): bn1/bn2 (BatchNorm1d) are only created when bn=True; default bn=None so they
    # are intentionally omitted.  nn.Dropout is created but never applied in forward (the drop
    # branch re-applies GELU), which the double GELU reproduces.
    print("KERNEL_OK")
</pallas_src>

<mosaic_0001>
module attributes {stable_mosaic.version = 11 : i64} {
  func.func @_combined_antialias_kernel(%arg0: i32, %arg1: memref<1x4x16xbf16, #tpu.memory_space<vmem>>, %arg2: memref<4x16x128xbf16, #tpu.memory_space<vmem>>, %arg3: memref<8x4xbf16, #tpu.memory_space<vmem>>, %arg4: memref<1x8x128xf32, #tpu.memory_space<vmem>>) attributes {dimension_semantics = [#tpu.dimension_semantics<parallel>], iteration_bounds = array<i64: 2>, scalar_prefetch = 0 : i64, scratch_operands = 0 : i64, tpu.core_type = #tpu.core_type<tc>, window_params = [{transform_indices = @transform_0, window_bounds = array<i64: 1, 4, 16>}, {pipeline_mode = #tpu.pipeline_mode<synchronous>, transform_indices = @transform_1, window_bounds = array<i64: 4, 16, 128>}, {pipeline_mode = #tpu.pipeline_mode<synchronous>, transform_indices = @transform_2, window_bounds = array<i64: 8, 4>}, {transform_indices = @transform_3, window_bounds = array<i64: 1, 8, 128>}]} {
    %c0 = arith.constant 0 : index
    %c0_0 = arith.constant 0 : index
    %c0_1 = arith.constant 0 : index
    %0 = vector.load %arg1[%c0, %c0_0, %c0_1] : memref<1x4x16xbf16, #tpu.memory_space<vmem>>, vector<1x4x16xbf16>
    %c0_2 = arith.constant 0 : index
    %c0_3 = arith.constant 0 : index
    %c0_4 = arith.constant 0 : index
    %1 = vector.load %arg2[%c0_2, %c0_3, %c0_4] : memref<4x16x128xbf16, #tpu.memory_space<vmem>>, vector<4x16x128xbf16>
    %c0_5 = arith.constant 0 : index
    %c0_6 = arith.constant 0 : index
    %2 = vector.load %arg3[%c0_5, %c0_6] : memref<8x4xbf16, #tpu.memory_space<vmem>>, vector<8x4xbf16>
    "tpu.trace_start"() <{level = 10 : i32, message = "bcl,clt->cbt"}> : () -> ()
    %cst = arith.constant dense<0.000000e+00> : vector<4x1x128xf32>
    %3 = tpu.matmul %0, %1, %cst {dimension_numbers = #tpu.dot_dimension_numbers<[2], [1], [0], [2], [0, 1, 0, 0, 1, 2], [1], [0]>} : vector<1x4x16xbf16>, vector<4x16x128xbf16>, vector<4x1x128xf32> -> vector<4x1x128xf32>
    "tpu.trace_stop"() : () -> ()
    %4 = vector.shape_cast %3 : vector<4x1x128xf32> to vector<4x128xf32>
    %5 = arith.truncf %4 : vector<4x128xf32> to vector<4x128xbf16>
    %cst_7 = arith.constant dense<0.000000e+00> : vector<8x128xf32>
    %6 = tpu.matmul %2, %5, %cst_7 {dimension_numbers = #tpu.dot_dimension_numbers<[1], [0], [0], [1], [0, 0, 1, 1], [], []>} : vector<8x4xbf16>, vector<4x128xbf16>, vector<8x128xf32> -> vector<8x128xf32>
    %cst_8 = arith.constant 5.000000e-01 : f32
    %7 = vector.broadcast %cst_8 : f32 to vector<8x128xf32>
    %8 = arith.mulf %7, %6 : vector<8x128xf32>
    %cst_9 = arith.constant 0.707106769 : f32
    %9 = vector.broadcast %cst_9 : f32 to vector<8x128xf32>
    %10 = arith.mulf %6, %9 : vector<8x128xf32>
    %11 = math.erf %10 : vector<8x128xf32>
    %cst_10 = arith.constant 1.000000e+00 : f32
    %12 = vector.broadcast %cst_10 : f32 to vector<8x128xf32>
    %13 = arith.addf %12, %11 : vector<8x128xf32>
    %14 = arith.mulf %8, %13 : vector<8x128xf32>
    %cst_11 = arith.constant 5.000000e-01 : f32
    %15 = vector.broadcast %cst_11 : f32 to vector<8x128xf32>
    %16 = arith.mulf %15, %14 : vector<8x128xf32>
    %cst_12 = arith.constant 0.707106769 : f32
    %17 = vector.broadcast %cst_12 : f32 to vector<8x128xf32>
    %18 = arith.mulf %14, %17 : vector<8x128xf32>
    %19 = math.erf %18 : vector<8x128xf32>
    %cst_13 = arith.constant 1.000000e+00 : f32
    %20 = vector.broadcast %cst_13 : f32 to vector<8x128xf32>
    %21 = arith.addf %20, %19 : vector<8x128xf32>
    %22 = arith.mulf %16, %21 : vector<8x128xf32>
    %c0_14 = arith.constant 0 : index
    %c0_15 = arith.constant 0 : index
    %c0_16 = arith.constant 0 : index
    %23 = vector.load %arg4[%c0_14, %c0_15, %c0_16] : memref<1x8x128xf32, #tpu.memory_space<vmem>>, vector<1x8x128xf32>
    %24 = vector.shape_cast %23 : vector<1x8x128xf32> to vector<8x128xf32>
    %25 = vector.shape_cast %22 : vector<8x128xf32> to vector<1x8x128xf32>
    tpu.vector_store %arg4[%c0_14, %c0_15, %c0_16], %25 {strides = array<i32>} : memref<1x8x128xf32, #tpu.memory_space<vmem>>, vector<1x8x128xf32>,
    return
  }
  func.func @transform_0(%arg0: i32) -> (i32, i32, i32) {
    %c0_i32 = arith.constant 0 : i32
    %c0_i32_0 = arith.constant 0 : i32
    %c0_i32_1 = arith.constant 0 : i32
    return %arg0, %c0_i32, %c0_i32_0 : i32, i32, i32
  }
  func.func @transform_1(%arg0: i32) -> (i32, i32, i32) {
    %c0_i32 = arith.constant 0 : i32
    %c0_i32_0 = arith.constant 0 : i32
    %c0_i32_1 = arith.constant 0 : i32
    %c0_i32_2 = arith.constant 0 : i32
    return %c0_i32, %c0_i32_0, %c0_i32_1 : i32, i32, i32
  }
  func.func @transform_2(%arg0: i32) -> (i32, i32) {
    %c0_i32 = arith.constant 0 : i32
    %c0_i32_0 = arith.constant 0 : i32
    %c0_i32_1 = arith.constant 0 : i32
    return %c0_i32, %c0_i32_0 : i32, i32
  }
  func.func @transform_3(%arg0: i32) -> (i32, i32, i32) {
    %c0_i32 = arith.constant 0 : i32
    %c0_i32_0 = arith.constant 0 : i32
    %c0_i32_1 = arith.constant 0 : i32
    return %arg0, %c0_i32, %c0_i32_0 : i32, i32, i32
  }
}

</mosaic_0001>

<llo_original>
// kernel: tpu_custom_call.1
$region0: #{tpu_custom_call.1}
  #allocation0 [shape = 'u32[]', space=smem, size = 0x4, offset = 0x4, fixed_abs, tag = 'smem constant byte address 0x4 - core index']
  #allocation1 [shape = 'u32[144,128]{1,0:T(1,128)}', space=vmem, size = 0x12000, scoped, tag = 'internal scratch']
  %s0 = inlined_call_operand.vmem [shape: bf16[2,4,16], index: 0, kind: input, shape index: {}]
  %s1 = inlined_call_operand.hbm [shape: bf16[4,16,128], index: 1, kind: input, shape index: {}]
  %s2 = inlined_call_operand.vmem [shape: bf16[8,4], index: 2, kind: input, shape index: {}]
  %s3 = inlined_call_operand.hbm [shape: f32[2,8,128], index: 3, kind: output, shape index: {}]
  %s4 = sld [smem:[#allocation0]]
  $region49: #{tpu_custom_call.1} parent=0
    _
  %s6 = ssub.s32 1, %s4
  %s7 = scalar_select 0, %s6, %s4
  $region1: #{tpu_custom_call.1} parent=0
    #allocation2 [shape = 'u8[16384]{0}', space=vmem, size = 0x4000, scoped, tag = 'input window, operand 1, single buffered']
    #allocation3 [shape = 's32[2]{0}', space=sflag, size = 0x8, scoped, tag = 'scoped memory for tpu_custom_call.1']
    #allocation4 [shape = 's32[2]{0}', space=sflag, size = 0x8, scoped, tag = 'scoped memory for tpu_custom_call.1']
    #allocation5 [shape = 'u8[8192]{0}', space=vmem, size = 0x2000, scoped, tag = 'output window, operand 0']
    %8 = vsyncpa [#allocation3], 0
    %9 = vsyncpa [#allocation4], 0
    %s10 = scalar_lea.sflag [#allocation4], 1
    %11 = vsyncpa %s10, 0
    loop: start=0, step=1, limit=4
    $region2: #{tpu_custom_call.1} parent=1 // loop_pre_header
      _
    $region3: #{tpu_custom_call.1} parent=1 // loop_header
      %s13 = sphi 0, %s17
      %p14 = scmp.ge.s32.totalorder %s13, 4
      %s23 = sphi 0, %s25
      %s26 = sphi 0, %s23
      %s27 = sphi 0, %s26
      %s43 = sphi 0, %s27
      %s47 = sphi 0, %s47
      %s49 = sphi 0, %s47
      %s50 = sphi 0, %s49
      %s64 = sphi 0, %s50
      %s68 = sphi 0, %s68
      %s70 = sphi 0, %s68
      %s71 = sphi 0, %s70
      %s85 = sphi 0, %s71
      %s91 = sphi 0, %s93
      %s94 = sphi 0, %s91
      %s95 = sphi 0, %s94
      %s111 = sphi 0, %s95
    $region4: #{tpu_custom_call.1} parent=1 // loop_header_branch
      %16 = sbr.rel (%p14) target = $region8
    $region5: #{tpu_custom_call.1} parent=1 // loop_body
      %s18 = ssub.s32 %s13, 1
      %s19 = ssub.s32 %s13, 2
      %s20 = sadd.s32 %s13, 1
      %s21 = ssub.s32 %s13, %s20
      %p22 = scmp.eq.s32.totalorder %s21, 0
      %s24 = sadd.s32 %s23, 1
      %s25 = scalar_select %p22, %s23, %s24
      %p28 = pneg %p22
      %p29 = scmp.eq.s32.totalorder %s13, 1
      %p30 = por %p28, %p29
      %p31 = scmp.ne.s32.totalorder %s23, %s26
      %p32 = scmp.eq.s32.totalorder %s13, 0
      %p33 = por %p31, %p32
      %p34 = scmp.ne.s32.totalorder %s23, %s26
      %p35 = scmp.eq.s32.totalorder %s18, 1
      %p36 = por %p34, %p35
      %p37 = scmp.ne.s32.totalorder %s26, %s27
      %p38 = scmp.eq.s32.totalorder %s18, 0
      %p39 = por %p37, %p38
      %p40 = scmp.ne.s32.totalorder %s26, %s27
      %p41 = scmp.eq.s32.totalorder %s19, 1
      %p42 = por %p40, %p41
      %p44 = scmp.ne.s32.totalorder %s27, %s43
      %p45 = scmp.eq.s32.totalorder %s19, 0
      %p46 = por %p44, %p45
      %s48 = sadd.s32 %s47, 1
      %p51 = scmp.eq.s32.totalorder %s13, 1
      %p52 = scmp.ne.s32.totalorder %s47, %s49
      %p53 = scmp.eq.s32.totalorder %s13, 0
      %p54 = por %p52, %p53
      %p55 = scmp.ne.s32.totalorder %s47, %s49
      %p56 = scmp.eq.s32.totalorder %s18, 1
      %p57 = por %p55, %p56
      %p58 = scmp.ne.s32.totalorder %s49, %s50
      %p59 = scmp.eq.s32.totalorder %s18, 0
      %p60 = por %p58, %p59
      %p61 = scmp.ne.s32.totalorder %s49, %s50
      %p62 = scmp.eq.s32.totalorder %s19, 1
      %p63 = por %p61, %p62
      %p65 = scmp.ne.s32.totalorder %s50, %s64
      %p66 = scmp.eq.s32.totalorder %s19, 0
      %p67 = por %p65, %p66
      %s69 = sadd.s32 %s68, 1
      %p72 = scmp.eq.s32.totalorder %s13, 1
      %p73 = scmp.ne.s32.totalorder %s68, %s70
      %p74 = scmp.eq.s32.totalorder %s13, 0
      %p75 = por %p73, %p74
      %p76 = scmp.ne.s32.totalorder %s68, %s70
      %p77 = scmp.eq.s32.totalorder %s18, 1
      %p78 = por %p76, %p77
      %p79 = scmp.ne.s32.totalorder %s70, %s71
      %p80 = scmp.eq.s32.totalorder %s18, 0
      %p81 = por %p79, %p80
      %p82 = scmp.ne.s32.totalorder %s70, %s71
      %p83 = scmp.eq.s32.totalorder %s19, 1
      %p84 = por %p82, %p83
      %p86 = scmp.ne.s32.totalorder %s71, %s85
      %p87 = scmp.eq.s32.totalorder %s19, 0
      %p88 = por %p86, %p87
      %s89 = ssub.s32 %s13, %s20
      %p90 = scmp.eq.s32.totalorder %s89, 0
      %s92 = sadd.s32 %s91, 1
      %s93 = scalar_select %p90, %s91, %s92
      %p96 = pneg %p90
      %p97 = scmp.eq.s32.totalorder %s13, 1
      %p98 = por %p96, %p97
      %p99 = scmp.ne.s32.totalorder %s91, %s94
      %p100 = scmp.eq.s32.totalorder %s13, 0
      %p101 = por %p99, %p100
      %p102 = scmp.ne.s32.totalorder %s91, %s94
      %p103 = scmp.eq.s32.totalorder %s18, 1
      %p104 = por %p102, %p103
      %p105 = scmp.ne.s32.totalorder %s94, %s95
      %p106 = scmp.eq.s32.totalorder %s18, 0
      %p107 = por %p105, %p106
      %p108 = scmp.ne.s32.totalorder %s94, %s95
      %p109 = scmp.eq.s32.totalorder %s19, 1
      %p110 = por %p108, %p109
      %p112 = scmp.ne.s32.totalorder %s95, %s111
      %p113 = scmp.eq.s32.totalorder %s19, 0
      %p114 = por %p112, %p113
      %p115 = scmp.le.s32.totalorder 1, %s13
      %p116 = scmp.lt.s32.totalorder %s13, 3
      %p117 = pnand %p115, %p116
      %p118 = pneg %p117
      // Predicated region
      $region9: #{tpu_custom_call.1} parent=5 // pred_check
        _
      $region10: #{tpu_custom_call.1} parent=5 // pred_check_branch
        %120 = sbr.rel (%p117) target = $region12
      $region11: #{tpu_custom_call.1} parent=5 // pred_region
        %s121 = ssub.s32 %s13, 1
        // Predicated region
        $region13: #{tpu_custom_call.1} parent=11 // pred_check
          %p122 = pneg %p60
        $region14: #{tpu_custom_call.1} parent=11 // pred_check_branch
          %124 = sbr.rel (%p122) target = $region16
        $region15: #{tpu_custom_call.1} parent=11 // pred_region
          %s126 = ssub.s32 512, 512
          %127 = vsyncadd [#allocation3], %s126
          %s128 = sshll.u32 [#allocation2], 4
          %s129 = int_to_ptr.vmem [resolvable:$true] %s128
          %134 = dma.hbm_to_vmem [thread:$0]  %s1, 512, %s129, [#allocation3], 64, 64, 4
        $region16: #{tpu_custom_call.1} parent=11 // pred_fallthru
          _
        // Predicated region
        $region17: #{tpu_custom_call.1} parent=11 // pred_check
          %p135 = pneg %p81
        $region18: #{tpu_custom_call.1} parent=11 // pred_check_branch
          %137 = sbr.rel (%p135) target = $region20
        $region19: #{tpu_custom_call.1} parent=11 // pred_region
          _
        $region20: #{tpu_custom_call.1} parent=11 // pred_fallthru
          _
      $region12: #{tpu_custom_call.1} parent=5 // pred_fallthru
        _
      %p138 = scmp.lt.s32.totalorder %s13, 2
      // Predicated region
      $region21: #{tpu_custom_call.1} parent=5 // pred_check
        %p139 = pneg %p138
      $region22: #{tpu_custom_call.1} parent=5 // pred_check_branch
        %141 = sbr.rel (%p139) target = $region24
      $region23: #{tpu_custom_call.1} parent=5 // pred_region
        // Predicated region
        $region25: #{tpu_custom_call.1} parent=23 // pred_check
          %p142 = pneg %p33
        $region26: #{tpu_custom_call.1} parent=23 // pred_check_branch
          %144 = sbr.rel (%p142) target = $region28
        $region27: #{tpu_custom_call.1} parent=23 // pred_region
          %p145 = scmp.lt.s32.totalorder %s13, 1
          %s146 = scalar_select %p145, %s13, 1
          %s147 = smul.addr %s146, 2
          %s148 = scalar_lea.vmem %s0, %s147
        $region28: #{tpu_custom_call.1} parent=23 // pred_fallthru
          _
      $region24: #{tpu_custom_call.1} parent=5 // pred_fallthru
        _
      %p149 = scmp.le.s32.totalorder 1, %s13
      %p150 = scmp.lt.s32.totalorder %s13, 3
      %p151 = pnand %p149, %p150
      %p152 = pneg %p151
      // Predicated region
      $region29: #{tpu_custom_call.1} parent=5 // pred_check
        _
      $region30: #{tpu_custom_call.1} parent=5 // pred_check_branch
        %154 = sbr.rel (%p151) target = $region32
      $region31: #{tpu_custom_call.1} parent=5 // pred_region
        %s155 = ssub.s32 %s13, 1
        // Predicated region
        $region33: #{tpu_custom_call.1} parent=31 // pred_check
          %p156 = pneg %p60
        $region34: #{tpu_custom_call.1} parent=31 // pred_check_branch
          %158 = sbr.rel (%p156) target = $region36
        $region35: #{tpu_custom_call.1} parent=31 // pred_region
          %159 = dma.done [#allocation3], 512
        $region36: #{tpu_custom_call.1} parent=31 // pred_fallthru
          _
        %p160 = scmp.lt.s32.totalorder %s18, 1
        %s161 = scalar_select %p160, %s18, 1
        %s162 = smul.addr %s161, 2
        %s163 = scalar_lea.vmem %s0, %s162
        %p164 = pneg %p39
        %p165 = pneg %p36
        %p166 = pneg %p60
        %p167 = pneg %p57
        %p168 = pneg %p81
        %p169 = pneg %p78
        %p170 = pneg %p107
        %p171 = pneg %p104
        %s172 = sand.u32 %s94, 1
        %s173 = scalar_lea.sflag [#allocation4], %s172
        %s174 = sand.u32 %s94, 1
        %s175 = smul.addr %s174, 8
        %s176 = scalar_lea.vmem [#allocation5], %s175
        %p177 = scmp.lt.s32.totalorder %s18, 1
        %s178 = scalar_select %p177, %s18, 1
        %s179 = smul.addr %s178, 2
        %s180 = scalar_lea.vmem %s0, %s179
        %v182 = vld [vmem:[%s180] sm:$0x3]
        %v183 = vld [vmem:[#allocation2] sm:$0xf]
        %v184 = vld [vmem:[#allocation2 + $0x4] sm:$0xf]
        %v185 = vld [vmem:[#allocation2 + $0x8] sm:$0xf]
        %v186 = vld [vmem:[#allocation2 + $0xc] sm:$0xf]
        %v187 = vld [vmem:[#allocation2 + $0x10] sm:$0xf]
        %v188 = vld [vmem:[#allocation2 + $0x14] sm:$0xf]
        %v189 = vld [vmem:[#allocation2 + $0x18] sm:$0xf]
        %v190 = vld [vmem:[#allocation2 + $0x1c] sm:$0xf]
        %v191 = vld [vmem:[%s2] sm:$0xf]
        %v194 = vpack.i.b16 0, %v182
        %v195 = vshrl.u32 %v182, 16
        %v196 = vshrl.u32 0, 16
        %v197 = vpack.i.b16 %v196, %v195
        %v200 = vunpack.c.l.s4 1934713408
        %v201 = vunpack.c.0.s8 %v200
        %v202 = vlaneseq
        %v203 = vshrl.u32 %v202, 7
        %v204 = vsub.s32 %v201, %v203
        %v205 = vrot.slane %v194, %v204
        %v206 = vcombine.high %v205, 0
        %v209 = vunpack.c.l.s4 1934713408
        %v210 = vunpack.c.0.s8 %v209
        %v211 = vlaneseq
        %v212 = vshrl.u32 %v211, 7
        %v213 = vsub.s32 %v210, %v212
        %v214 = vrot.slane %v197, %v213
        %v215 = vcombine.high %v214, 0
        %v218 = vunpack.c.l.b16 %v183
        %v219 = vunpack.c.l.b16 %v184
        %v220 = vpack.c.b16 %v219, %v218
        %vm222 = vcmask 130048
        %v224 = vsel %vm222, %v205, 0
        %226 = vmatprep.subr.bf16.mxu0 0
        %227 = vmatpush1.bf16.msra.mxu0 %v220
        %228 = vmatprep.subr.bf16.mxu0 0
        %229 = vmatpush1.bf16.msra.mxu0 0
        %230 = vmatprep.subr.bf16.mxu0 0
        %231 = vmatpush1.bf16.msra.mxu0 0
        %232 = vmatprep.subr.bf16.mxu0 0
        %233 = vmatpush1.bf16.msra.mxu0 0
        %234 = vmatprep.subr.bf16.mxu0 0
        %235 = vmatpush1.bf16.msra.mxu0 0
        %236 = vmatprep.subr.bf16.mxu0 0
        %237 = vmatpush1.bf16.msra.mxu0 0
        %238 = vmatprep.subr.bf16.mxu0 0
        %239 = vmatpush1.bf16.msra.mxu0 0
        %240 = vmatprep.subr.bf16.mxu0 0
        %241 = vmatpush1.bf16.msra.mxu0 0
        %242 = vmatprep.subr.bf16.mxu0 0
        %243 = vmatpush1.bf16.msra.mxu0 0
        %244 = vmatprep.subr.bf16.mxu0 0
        %245 = vmatpush1.bf16.msra.mxu0 0
        %246 = vmatprep.subr.bf16.mxu0 0
        %247 = vmatpush1.bf16.msra.mxu0 0
        %248 = vmatprep.subr.bf16.mxu0 0
        %249 = vmatpush1.bf16.msra.mxu0 0
        %250 = vmatprep.subr.bf16.mxu0 0
        %251 = vmatpush1.bf16.msra.mxu0 0
        %252 = vmatprep.subr.bf16.mxu0 0
        %253 = vmatpush1.bf16.msra.mxu0 0
        %254 = vmatprep.subr.bf16.mxu0 0
        %255 = vmatpush1.bf16.msra.mxu0 0
        %256 = vmatprep.subr.bf16.mxu0 0
        %257 = vmatpush1.bf16.msra.mxu0 0
        %258 = vmatprep.mubr.bf16.mxu0 0
        %259 = vmatmul.mubr.bf16.gmra.mrb[0].mxu0 %v224
        %v260 = vpop.f32.mrb[0].mxu0
        %v261 = vadd.f32 0.0, %v260
        %v262 = vpop.f32.mrb[0].mxu0
        %v263 = vpop.f32.mrb[0].mxu0
        %v264 = vpop.f32.mrb[0].mxu0
        %265 = vdwg.mxu0
        %v268 = vunpack.c.l.b16 %v185
        %v269 = vunpack.c.l.b16 %v186
        %v270 = vpack.c.b16 %v269, %v268
        %v273 = vsel %vm222, %v214, 0
        %275 = vmatprep.subr.bf16.mxu0 0
        %276 = vmatpush1.bf16.msra.mxu0 %v270
        %277 = vmatprep.subr.bf16.mxu0 0
        %278 = vmatpush1.bf16.msra.mxu0 0
        %279 = vmatprep.subr.bf16.mxu0 0
        %280 = vmatpush1.bf16.msra.mxu0 0
        %281 = vmatprep.subr.bf16.mxu0 0
        %282 = vmatpush1.bf16.msra.mxu0 0
        %283 = vmatprep.subr.bf16.mxu0 0
        %284 = vmatpush1.bf16.msra.mxu0 0
        %285 = vmatprep.subr.bf16.mxu0 0
        %286 = vmatpush1.bf16.msra.mxu0 0
        %287 = vmatprep.subr.bf16.mxu0 0
        %288 = vmatpush1.bf16.msra.mxu0 0
        %289 = vmatprep.subr.bf16.mxu0 0
        %290 = vmatpush1.bf16.msra.mxu0 0
        %291 = vmatprep.subr.bf16.mxu0 0
        %292 = vmatpush1.bf16.msra.mxu0 0
        %293 = vmatprep.subr.bf16.mxu0 0
        %294 = vmatpush1.bf16.msra.mxu0 0
        %295 = vmatprep.subr.bf16.mxu0 0
        %296 = vmatpush1.bf16.msra.mxu0 0
        %297 = vmatprep.subr.bf16.mxu0 0
        %298 = vmatpush1.bf16.msra.mxu0 0
        %299 = vmatprep.subr.bf16.mxu0 0
        %300 = vmatpush1.bf16.msra.mxu0 0
        %301 = vmatprep.subr.bf16.mxu0 0
        %302 = vmatpush1.bf16.msra.mxu0 0
        %303 = vmatprep.subr.bf16.mxu0 0
        %304 = vmatpush1.bf16.msra.mxu0 0
        %305 = vmatprep.subr.bf16.mxu0 0
        %306 = vmatpush1.bf16.msra.mxu0 0
        %307 = vmatprep.mubr.bf16.mxu0 0
        %308 = vmatmul.mubr.bf16.gmra.mrb[0].mxu0 %v273
        %v309 = vpop.f32.mrb[0].mxu0
        %v310 = vadd.f32 0.0, %v309
        %v311 = vpop.f32.mrb[0].mxu0
        %v312 = vpop.f32.mrb[0].mxu0
        %v313 = vpop.f32.mrb[0].mxu0
        %314 = vdwg.mxu0
        %v317 = vunpack.c.l.b16 %v187
        %v318 = vunpack.c.l.b16 %v188
        %v319 = vpack.c.b16 %v318, %v317
        %v322 = vsel %vm222, %v206, 0
        %324 = vmatprep.subr.bf16.mxu0 0
        %325 = vmatpush1.bf16.msra.mxu0 %v319
        %326 = vmatprep.subr.bf16.mxu0 0
        %327 = vmatpush1.bf16.msra.mxu0 0
        %328 = vmatprep.subr.bf16.mxu0 0
        %329 = vmatpush1.bf16.msra.mxu0 0
        %330 = vmatprep.subr.bf16.mxu0 0
        %331 = vmatpush1.bf16.msra.mxu0 0
        %332 = vmatprep.subr.bf16.mxu0 0
        %333 = vmatpush1.bf16.msra.mxu0 0
        %334 = vmatprep.subr.bf16.mxu0 0
        %335 = vmatpush1.bf16.msra.mxu0 0
        %336 = vmatprep.subr.bf16.mxu0 0
        %337 = vmatpush1.bf16.msra.mxu0 0
        %338 = vmatprep.subr.bf16.mxu0 0
        %339 = vmatpush1.bf16.msra.mxu0 0
        %340 = vmatprep.subr.bf16.mxu0 0
        %341 = vmatpush1.bf16.msra.mxu0 0
        %342 = vmatprep.subr.bf16.mxu0 0
        %343 = vmatpush1.bf16.msra.mxu0 0
        %344 = vmatprep.subr.bf16.mxu0 0
        %345 = vmatpush1.bf16.msra.mxu0 0
        %346 = vmatprep.subr.bf16.mxu0 0
        %347 = vmatpush1.bf16.msra.mxu0 0
        %348 = vmatprep.subr.bf16.mxu0 0
        %349 = vmatpush1.bf16.msra.mxu0 0
        %350 = vmatprep.subr.bf16.mxu0 0
        %351 = vmatpush1.bf16.msra.mxu0 0
        %352 = vmatprep.subr.bf16.mxu0 0
        %353 = vmatpush1.bf16.msra.mxu0 0
        %354 = vmatprep.subr.bf16.mxu0 0
        %355 = vmatpush1.bf16.msra.mxu0 0
        %356 = vmatprep.mubr.bf16.mxu0 0
        %357 = vmatmul.mubr.bf16.gmra.mrb[0].mxu0 %v322
        %v358 = vpop.f32.mrb[0].mxu0
        %v359 = vadd.f32 0.0, %v358
        %v360 = vpop.f32.mrb[0].mxu0
        %v361 = vpop.f32.mrb[0].mxu0
        %v362 = vpop.f32.mrb[0].mxu0
        %363 = vdwg.mxu0
        %v366 = vunpack.c.l.b16 %v189
        %v367 = vunpack.c.l.b16 %v190
        %v368 = vpack.c.b16 %v367, %v366
        %v371 = vsel %vm222, %v215, 0
        %373 = vmatprep.subr.bf16.mxu0 0
        %374 = vmatpush1.bf16.msra.mxu0 %v368
        %375 = vmatprep.subr.bf16.mxu0 0
        %376 = vmatpush1.bf16.msra.mxu0 0
        %377 = vmatprep.subr.bf16.mxu0 0
        %378 = vmatpush1.bf16.msra.mxu0 0
        %379 = vmatprep.subr.bf16.mxu0 0
        %380 = vmatpush1.bf16.msra.mxu0 0
        %381 = vmatprep.subr.bf16.mxu0 0
        %382 = vmatpush1.bf16.msra.mxu0 0
        %383 = vmatprep.subr.bf16.mxu0 0
        %384 = vmatpush1.bf16.msra.mxu0 0
        %385 = vmatprep.subr.bf16.mxu0 0
        %386 = vmatpush1.bf16.msra.mxu0 0
        %387 = vmatprep.subr.bf16.mxu0 0
        %388 = vmatpush1.bf16.msra.mxu0 0
        %389 = vmatprep.subr.bf16.mxu0 0
        %390 = vmatpush1.bf16.msra.mxu0 0
        %391 = vmatprep.subr.bf16.mxu0 0
        %392 = vmatpush1.bf16.msra.mxu0 0
        %393 = vmatprep.subr.bf16.mxu0 0
        %394 = vmatpush1.bf16.msra.mxu0 0
        %395 = vmatprep.subr.bf16.mxu0 0
        %396 = vmatpush1.bf16.msra.mxu0 0
        %397 = vmatprep.subr.bf16.mxu0 0
        %398 = vmatpush1.bf16.msra.mxu0 0
        %399 = vmatprep.subr.bf16.mxu0 0
        %400 = vmatpush1.bf16.msra.mxu0 0
        %401 = vmatprep.subr.bf16.mxu0 0
        %402 = vmatpush1.bf16.msra.mxu0 0
        %403 = vmatprep.subr.bf16.mxu0 0
        %404 = vmatpush1.bf16.msra.mxu0 0
        %405 = vmatprep.mubr.bf16.mxu0 0
        %406 = vmatmul.mubr.bf16.gmra.mrb[0].mxu0 %v371
        %v407 = vpop.f32.mrb[0].mxu0
        %v408 = vadd.f32 0.0, %v407
        %v409 = vpop.f32.mrb[0].mxu0
        %v410 = vpop.f32.mrb[0].mxu0
        %v411 = vpop.f32.mrb[0].mxu0
        %412 = vdwg.mxu0
        %v413 = vpack.c.bf16 %v261, %v261
        %v414 = vpack.c.bf16 %v310, %v310
        %v415 = vpack.c.bf16 %v359, %v359
        %v416 = vpack.c.bf16 %v408, %v408
        %v421 = vunpack.c.l.b16 %v413
        %v422 = vunpack.c.l.b16 %v414
        %v423 = vunpack.c.l.b16 %v415
        %v424 = vunpack.c.l.b16 %v416
        %v425 = vrot.slane %v422, 7
        %vm426 = vcmask 1041409
        %v427 = vsel %vm426, %v425, %v421
        %v428 = vrot.slane %v423, 6
        %vm429 = vcmask 1042434
        %v430 = vsel %vm429, %v428, %v427
        %v431 = vrot.slane %v424, 5
        %vm432 = vcmask 1043459
        %v433 = vsel %vm432, %v431, %v430
        %v434 = vpack.c.b16 %v433, %v433
        %vm435 = vcmask 31744
        %v437 = vsel %vm435, %v191, 0
        %vm439 = vcmask 1041408
        %v441 = vsel %vm439, %v434, 0
        %443 = vmatprep.subr.bf16.mxu0 0
        %444 = vmatpush1.bf16.msra.mxu0 %v441
        %445 = vmatprep.subr.bf16.mxu0 0
        %446 = vmatpush1.bf16.msra.mxu0 0
        %447 = vmatprep.subr.bf16.mxu0 0
        %448 = vmatpush1.bf16.msra.mxu0 0
        %449 = vmatprep.subr.bf16.mxu0 0
        %450 = vmatpush1.bf16.msra.mxu0 0
        %451 = vmatprep.subr.bf16.mxu0 0
        %452 = vmatpush1.bf16.msra.mxu0 0
        %453 = vmatprep.subr.bf16.mxu0 0
        %454 = vmatpush1.bf16.msra.mxu0 0
        %455 = vmatprep.subr.bf16.mxu0 0
        %456 = vmatpush1.bf16.msra.mxu0 0
        %457 = vmatprep.subr.bf16.mxu0 0
        %458 = vmatpush1.bf16.msra.mxu0 0
        %459 = vmatprep.subr.bf16.mxu0 0
        %460 = vmatpush1.bf16.msra.mxu0 0
        %461 = vmatprep.subr.bf16.mxu0 0
        %462 = vmatpush1.bf16.msra.mxu0 0
        %463 = vmatprep.subr.bf16.mxu0 0
        %464 = vmatpush1.bf16.msra.mxu0 0
        %465 = vmatprep.subr.bf16.mxu0 0
        %466 = vmatpush1.bf16.msra.mxu0 0
        %467 = vmatprep.subr.bf16.mxu0 0
        %468 = vmatpush1.bf16.msra.mxu0 0
        %469 = vmatprep.subr.bf16.mxu0 0
        %470 = vmatpush1.bf16.msra.mxu0 0
        %471 = vmatprep.subr.bf16.mxu0 0
        %472 = vmatpush1.bf16.msra.mxu0 0
        %473 = vmatprep.subr.bf16.mxu0 0
        %474 = vmatpush1.bf16.msra.mxu0 0
        %475 = vmatprep.mubr.bf16.mxu0 0
        %476 = vmatmul.mubr.bf16.gmra.mrb[0].mxu0 %v437
        %v477 = vpop.f32.mrb[0].mxu0
        %v478 = vadd.f32 0.0, %v477
        %v479 = vpop.f32.mrb[0].mxu0
        %v480 = vpop.f32.mrb[0].mxu0
        %v481 = vpop.f32.mrb[0].mxu0
        %482 = vdwg.mxu0
        %v483 = vmul.f32 %v478, 0.5
        %v484 = vmul.f32 %v478, 0.70710677
        %v485 = verf.f32.pop %v484
        %v486 = vadd.f32 %v485, 1.0
        %v487 = vmul.f32 %v483, %v486
        %v488 = vmul.f32 %v487, 0.5
        %v489 = vmul.f32 %v487, 0.70710677
        %v490 = verf.f32.pop %v489
        %v491 = vadd.f32 %v490, 1.0
        %v492 = vmul.f32 %v488, %v491
        %493 = vst [vmem:[%s176] sm:$0xff] %v492
        %s494 = sand.u32 %s94, 1
        %s495 = scalar_lea.sflag [#allocation4], %s494
        %s496 = sand.u32 %s94, 1
        %s497 = smul.addr %s496, 8
        %s498 = scalar_lea.vmem [#allocation5], %s497
        // Predicated region
        $region37: #{tpu_custom_call.1} parent=31 // pred_check
          %p499 = pneg %p104
        $region38: #{tpu_custom_call.1} parent=31 // pred_check_branch
          %501 = sbr.rel (%p499) target = $region40
        $region39: #{tpu_custom_call.1} parent=31 // pred_region
          %s503 = ssub.s32 128, 128
          %504 = vsyncadd %s495, %s503
          %s505 = smul.addr %s18, 128
          %s506 = scalar_lea.hbm %s3, %s505
          %s508 = sshll.u32 %s498, 4
          %s509 = int_to_ptr.vmem [resolvable:$true] %s508
          %511 = dma.vmem_to_hbm [thread:$0]  %s509, 128, %s506, %s495
        $region40: #{tpu_custom_call.1} parent=31 // pred_fallthru
          _
      $region32: #{tpu_custom_call.1} parent=5 // pred_fallthru
        _
      %p512 = scmp.le.s32.totalorder 2, %s13
      // Predicated region
      $region41: #{tpu_custom_call.1} parent=5 // pred_check
        %p513 = pneg %p512
      $region42: #{tpu_custom_call.1} parent=5 // pred_check_branch
        %515 = sbr.rel (%p513) target = $region44
      $region43: #{tpu_custom_call.1} parent=5 // pred_region
        %s516 = ssub.s32 %s13, 2
        // Predicated region
        $region45: #{tpu_custom_call.1} parent=43 // pred_check
          %p517 = pneg %p110
        $region46: #{tpu_custom_call.1} parent=43 // pred_check_branch
          %519 = sbr.rel (%p517) target = $region48
        $region47: #{tpu_custom_call.1} parent=43 // pred_region
          %s520 = sand.u32 %s95, 1
          %s521 = scalar_lea.sflag [#allocation4], %s520
          %s522 = sand.u32 %s95, 1
          %s523 = smul.addr %s522, 8
          %s524 = scalar_lea.vmem [#allocation5], %s523
          %525 = dma.done %s521, 128
        $region48: #{tpu_custom_call.1} parent=43 // pred_fallthru
          _
      $region44: #{tpu_custom_call.1} parent=5 // pred_fallthru
        _
    $region6: #{tpu_custom_call.1} parent=1 // loop_footer
      %s17 = sadd.s32 1, %s13
    $region7: #{tpu_custom_call.1} parent=1 // loop_footer_branch
      %12 = sbr.rel target = $region3
    $region8: #{tpu_custom_call.1} parent=1 // loop_exit
      _
    %526 = vsyncpa [#allocation3], 1
    %s527 = scalar_lea.sflag [#allocation3], 1
    %528 = vsyncpa %s527, 1
    %529 = vsyncpa [#allocation4], 1
    %s530 = scalar_lea.sflag [#allocation4], 1
    %531 = vsyncpa %s530, 1

</llo_original>
